<compile_context>
chip_gen: v7x
topology: tpu7x:2x2x1
jax: 0.10.0
libtpu: 0.0.40
codegen_flags: <defaults>
</compile_context>

<pallas_src>
import numpy as np
import jax
import jax.numpy as jnp
from jax.experimental import pallas as pl
from jax.experimental.pallas import tpu as pltpu


# --------------------------------------------------------------------------- #
# VMEM-aware tile sizing
# --------------------------------------------------------------------------- #
def _vmem_capacity_bytes() -> int:
    try:
        return int(pltpu.get_tpu_info().vmem_capacity_bytes)
    except Exception:
        return 64 << 20  # conservative (v7x-sized) fallback


def _choose_block_rows(n_rows: int, dim: int, emit_logits: bool,
                       mxu_bytes: int) -> int:
    """Pick the row tile TM.

    Preference order (per the perf review):
      1. MXU-shaped TM (128/256) that leaves a >=2-step grid (v7x megacore).
      2. Any multiple-of-8 divisor of N that leaves a >=2-step grid.
      3. MXU-shaped TM with a single grid step.
      4. Any multiple-of-8 divisor of N, else the whole array as one tile.
    All candidates are bounded by a per-generation VMEM budget.
    """
    N, D = n_rows, dim
    budget = int(_vmem_capacity_bytes() * 0.6)        # headroom for compiler scratch
    resident = 2 * N * D * mxu_bytes                  # double-buffered (D, N) MXU RHS
    avail = max(budget - resident, 2 << 20)
    # rough per-row f32 working set ((row, N) intermediates + logits writeback)
    per_row = 4 * N * (12 if emit_logits else 6) + 4 * D * mxu_bytes + 32
    cap_rows = max(8, avail // per_row)

    m8 = [tm for tm in range(8, min(N, cap_rows) + 1, 8) if N % tm == 0]
    mxu_shaped = [tm for tm in (128, 256) if tm in m8]

    for cands, need_multi in ((mxu_shaped, True), (m8, True),
                              (mxu_shaped, False), (m8, False)):
        pick = [tm for tm in cands if (not need_multi or N // tm >= 2)]
        if pick:
            return max(pick)
    return N  # tiny N: single resident tile


def _vmem_limit_bytes(N: int, D: int, TM: int, emit_logits: bool,
                      mxu_bytes: int) -> int:
    cap = _vmem_capacity_bytes()
    resident = 2 * N * D * mxu_bytes                  # double-buffered (D, N) RHS
    per_tile = TM * (4 * N * (12 if emit_logits else 6) + 2 * D * mxu_bytes + 32)
    est = resident + per_tile + (4 << 20)
    # Never request the full physical VMEM (esp. on v7x's 64 MiB).
    return int(min(max(est, 16 << 20), int(cap * 0.85)))


# --------------------------------------------------------------------------- #
# Kernel
# --------------------------------------------------------------------------- #
def _build_ntxent_kernel(*, batch_size: int, n_rows: int, tile_rows: int,
                         emit_logits: bool):
    B, N, TM = batch_size, n_rows, tile_rows

    def kernel(lhs_ref, rhs_ref, pos_ref, *out_refs):
        if emit_logits:
            logits_ref, rowloss_ref = out_refs
        else:
            (rowloss_ref,) = out_refs

        # sim / T on the MXU: canonical (TM, D) x (D, N) feed, f32 accumulation.
        # LHS rows are pre-normalized (cosine mode) and pre-scaled by 1/T in the
        # wrapper; RHS is pre-normalized, pre-transposed and pre-cast once.
        s = jax.lax.dot_general(
            lhs_ref[...], rhs_ref[...],
            dimension_numbers=(((1,), (0,)), ((), ())),
            preferred_element_type=jnp.float32)                       # (TM, N)

        pos = pos_ref[...]                                            # (TM, 1) f32
        row_g = (pl.program_id(0) * TM
                 + jax.lax.broadcasted_iota(jnp.int32, (TM, 1), 0))   # global rows
        col = jax.lax.broadcasted_iota(jnp.int32, (TM, N), 1)

        # Row-wise logsumexp over j != i.  The diagonal is masked for BOTH
        # similarity modes (robust against bf16 rounding / small temperatures).
        masked = jnp.where(col == row_g, -1e30, s)
        m = jnp.max(masked, axis=-1, keepdims=True)
        lse = m + jnp.log(jnp.sum(jnp.exp(masked - m), axis=-1, keepdims=True))

        # Per-row cross-entropy term; summed (and divided by N) in the wrapper.
        rowloss_ref[...] = lse - pos                                  # (TM, 1)

        if emit_logits:
            # Row g of logits is [positive] followed by the N-2 columns of
            # sim/T with columns d0 = g mod B and d1 = d0 + B removed —
            # expressed as selects over statically shifted views of the sim
            # tile (no per-row gather).  The shifted views use explicit
            # concatenates (unambiguous semantics); they could be replaced by
            # pltpu.roll XLU rotations once verified on the target toolchain.
            d0 = jnp.where(row_g < B, row_g, row_g - B)
            d1 = d0 + B
            s_m1 = jnp.concatenate([s[:, N - 1:], s[:, :N - 1]], axis=1)  # s[:, k-1]
            s_p1 = jnp.concatenate([s[:, 1:], s[:, :1]], axis=1)          # s[:, k+1]
            neg = jnp.where(col <= d0, s_m1, jnp.where(col < d1, s, s_p1))
            packed = jnp.where(col == 0, pos, neg)                        # (TM, N)
            logits_ref[...] = packed[:, :N - 1].astype(logits_ref.dtype)

    return kernel


# --------------------------------------------------------------------------- #
# Wrapper module
# --------------------------------------------------------------------------- #
def _row_normalize(x):
    sq = jnp.sum(x * x, axis=-1, keepdims=True)
    # torch CosineSimilarity clamps norms near 1e-8; clamp ||x||^2 at 1e-16.
    return x * jax.lax.rsqrt(jnp.maximum(sq, 1e-16))


class NTXentLossPallas:
    """JAX/Pallas port of NTXentLoss.forward(zis, zjs) -> (logits, labels, loss)."""

    def __init__(self, batch_size, temperature, use_cosine_similarity=True, *,
                 mxu_dtype=jnp.bfloat16, logits_dtype=jnp.float32,
                 return_logits=True, block_rows=None):
        assert batch_size >= 2, "batch_size must be >= 2"
        self.batch_size = int(batch_size)
        self.temperature = float(temperature)
        self.use_cosine_similarity = bool(use_cosine_similarity)
        self.mxu_dtype = jnp.dtype(mxu_dtype)
        self.logits_dtype = jnp.dtype(logits_dtype)
        self.return_logits = bool(return_logits)
        self._block_rows = None if block_rows is None else int(block_rows)
        self._forward = jax.jit(self._forward_impl)

    def _forward_impl(self, zis, zjs):
        B = self.batch_size
        N = 2 * B
        D = zis.shape[-1]
        emit_logits = self.return_logits
        mxu_bytes = self.mxu_dtype.itemsize
        inv_t = 1.0 / self.temperature

        TM = (self._block_rows if self._block_rows is not None
              else _choose_block_rows(N, D, emit_logits, mxu_bytes))
        assert N % TM == 0 and (TM == N or TM % 8 == 0), (
            "block_rows must divide 2*batch_size and be a multiple of 8 "
            "(or equal 2*batch_size)")

        # ---- O(N*D) prep, done ONCE by XLA (per the perf review): ----
        zi = zis.astype(jnp.float32)
        zj = zjs.astype(jnp.float32)
        if self.use_cosine_similarity:
            zi = _row_normalize(zi)
            zj = _row_normalize(zj)
        reps = jnp.concatenate([zj, zi], axis=0)        # row g   (torch: cat([zjs, zis]))
        partner = jnp.concatenate([zi, zj], axis=0)     # row (g + B) mod N

        pos = jnp.sum(reps * partner, axis=-1, keepdims=True) * inv_t   # (N, 1) f32
        lhs = (reps * inv_t).astype(self.mxu_dtype)                     # (N, D)
        rhs_t = reps.T.astype(self.mxu_dtype)                           # (D, N) resident

        kernel = _build_ntxent_kernel(batch_size=B, n_rows=N, tile_rows=TM,
                                      emit_logits=emit_logits)

        rowloss_spec = pl.BlockSpec((TM, 1), lambda i: (i, 0))
        if emit_logits:
            out_shape = (jax.ShapeDtypeStruct((N, N - 1), self.logits_dtype),
                         jax.ShapeDtypeStruct((N, 1), jnp.float32))
            out_specs = (pl.BlockSpec((TM, N - 1), lambda i: (i, 0)), rowloss_spec)
        else:
            out_shape = jax.ShapeDtypeStruct((N, 1), jnp.float32)
            out_specs = rowloss_spec

        outs = pl.pallas_call(
            kernel,
            out_shape=out_shape,
            grid=(N // TM,),
            in_specs=[
                pl.BlockSpec((TM, D), lambda i: (i, 0)),   # LHS row tile (pipelined)
                pl.BlockSpec((D, N), lambda i: (0, 0)),    # resident pre-cast MXU RHS
                pl.BlockSpec((TM, 1), lambda i: (i, 0)),   # positives / T
            ],
            out_specs=out_specs,
            compiler_params=pltpu.CompilerParams(
                dimension_semantics=("parallel",),
                vmem_limit_bytes=_vmem_limit_bytes(N, D, TM, emit_logits,
                                                   mxu_bytes)),
        )(lhs, rhs_t, pos)

        if emit_logits:
            logits, rowloss = outs
        else:
            logits, rowloss = None, outs

        loss = jnp.sum(rowloss) / N                 # CrossEntropy(sum) / (2*batch)
        labels = jnp.zeros((N,), dtype=jnp.int32)   # torch uses int64; int32 under x32
        return logits, labels, loss

    def __call__(self, zis, zjs):
        return self._forward(zis, zjs)


# --------------------------------------------------------------------------- #
# Reference + self-test
# --------------------------------------------------------------------------- #
def _reference_numpy(zis, zjs, batch_size, temperature, use_cosine_similarity):
    """float64 numpy reference mirroring the PyTorch module."""
    B = batch_size
    N = 2 * B
    reps = np.concatenate(
        [np.asarray(zjs, np.float64), np.asarray(zis, np.float64)], axis=0)
    if use_cosine_similarity:
        nrm = np.linalg.norm(reps, axis=1, keepdims=True)
        sim = (reps @ reps.T) / np.maximum(nrm * nrm.T, 1e-8)
    else:
        sim = reps @ reps.T
    l_pos = np.diag(sim, k=B)
    r_pos = np.diag(sim, k=-B)
    positives = np.concatenate([l_pos, r_pos]).reshape(N, 1)
    mask = (1 - (np.eye(N) + np.eye(N, N, k=-B) + np.eye(N, N, k=B))).astype(bool)
    negatives = sim[mask].reshape(N, -1)
    logits = np.concatenate([positives, negatives], axis=1) / temperature
    m = logits.max(axis=1, keepdims=True)
    lse = (m + np.log(np.exp(logits - m).sum(axis=1, keepdims=True)))[:, 0]
    loss = float(np.sum(lse - logits[:, 0]) / N)
    return logits, loss


if __name__ == "__main__":
    key = jax.random.PRNGKey(0)

    def _check(batch, dim, temperature, use_cosine, mxu_dtype, tol,
               return_logits=True):
        k1, k2 = jax.random.split(
            jax.random.fold_in(key, batch * 1000 + dim + int(use_cosine)))
        zis = jax.random.normal(k1, (batch, dim), dtype=jnp.float32)
        zjs = jax.random.normal(k2, (batch, dim), dtype=jnp.float32)
        mod = NTXentLossPallas(batch, temperature, use_cosine,
                               mxu_dtype=mxu_dtype, return_logits=return_logits)
        logits, labels, loss = mod(zis, zjs)
        ready = (logits, labels, loss) if return_logits else (labels, loss)
        jax.block_until_ready(ready)
        ref_logits, ref_loss = _reference_numpy(zis, zjs, batch, temperature,
                                                use_cosine)
        N = 2 * batch
        assert labels.shape == (N,) and int(jnp.sum(labels)) == 0
        np.testing.assert_allclose(float(loss), ref_loss, rtol=tol, atol=tol)
        if return_logits:
            assert logits.shape == (N, N - 1)
            np.testing.assert_allclose(np.asarray(logits, np.float64), ref_logits,
                                       rtol=tol, atol=tol)

    # Small shape, single tile: cosine similarity, f32 MXU (tight check).
    _check(batch=4, dim=32, temperature=0.5, use_cosine=True,
           mxu_dtype=jnp.float32, tol=2e-3)
    # Dot-similarity path, single tile.
    _check(batch=4, dim=32, temperature=0.5, use_cosine=False,
           mxu_dtype=jnp.float32, tol=2e-3)
    # bf16 MXU operands (default), cosine, single tile.
    _check(batch=4, dim=32, temperature=0.5, use_cosine=True,
           mxu_dtype=jnp.bfloat16, tol=3e-2)
    # Multi-tile path (TM=64, grid=(2,), "parallel" row axis), cosine, f32.
    _check(batch=64, dim=32, temperature=0.5, use_cosine=True,
           mxu_dtype=jnp.float32, tol=2e-3)
    # MXU-shaped multi-tile path (TM=128, grid=(2,)), cosine, f32.
    _check(batch=128, dim=32, temperature=0.5, use_cosine=True,
           mxu_dtype=jnp.float32, tol=2e-3)
    # Multi-tile dot-similarity path.
    _check(batch=128, dim=32, temperature=0.5, use_cosine=False,
           mxu_dtype=jnp.float32, tol=2e-3)
    # Loss-only mode (skips the logits writeback entirely), bf16, multi-tile.
    _check(batch=128, dim=32, temperature=0.5, use_cosine=True,
           mxu_dtype=jnp.bfloat16, tol=3e-2, return_logits=False)

    print("KERNEL_OK")
</pallas_src>

<mosaic_0001>
module attributes {stable_mosaic.version = 11 : i64} {
  func.func @kernel(%arg0: i32, %arg1: memref<8x32xf32, #tpu.memory_space<vmem>>, %arg2: memref<32x8xf32, #tpu.memory_space<vmem>>, %arg3: memref<8x1xf32, #tpu.memory_space<vmem>>, %arg4: memref<8x7xf32, #tpu.memory_space<vmem>>, %arg5: memref<8x1xf32, #tpu.memory_space<vmem>>) attributes {dimension_semantics = [#tpu.dimension_semantics<parallel>], iteration_bounds = array<i64: 1>, scalar_prefetch = 0 : i64, scratch_operands = 0 : i64, tpu.core_type = #tpu.core_type<tc>, window_params = [{transform_indices = @transform_0, window_bounds = array<i64: 8, 32>}, {pipeline_mode = #tpu.pipeline_mode<synchronous>, transform_indices = @transform_1, window_bounds = array<i64: 32, 8>}, {transform_indices = @transform_2, window_bounds = array<i64: 8, 1>}, {transform_indices = @transform_3, window_bounds = array<i64: 8, 7>}, {transform_indices = @transform_4, window_bounds = array<i64: 8, 1>}]} {
    %c0 = arith.constant 0 : index
    %c0_0 = arith.constant 0 : index
    %0 = vector.load %arg1[%c0, %c0_0] : memref<8x32xf32, #tpu.memory_space<vmem>>, vector<8x32xf32>
    %c0_1 = arith.constant 0 : index
    %c0_2 = arith.constant 0 : index
    %1 = vector.load %arg2[%c0_1, %c0_2] : memref<32x8xf32, #tpu.memory_space<vmem>>, vector<32x8xf32>
    %cst = arith.constant dense<0.000000e+00> : vector<8x8xf32>
    %2 = tpu.matmul %0, %1, %cst {dimension_numbers = #tpu.dot_dimension_numbers<[1], [0], [0], [1], [0, 0, 1, 1], [], []>} : vector<8x32xf32>, vector<32x8xf32>, vector<8x8xf32> -> vector<8x8xf32>
    %c0_3 = arith.constant 0 : index
    %c0_4 = arith.constant 0 : index
    %3 = vector.load %arg3[%c0_3, %c0_4] : memref<8x1xf32, #tpu.memory_space<vmem>>, vector<8x1xf32>
    %c8_i32 = arith.constant 8 : i32
    %4 = arith.muli %arg0, %c8_i32 : i32
    %5 = tpu.iota {dimensions = array<i32: 0>} : vector<8x1xi32>
    %6 = vector.broadcast %4 : i32 to vector<8x1xi32>
    %7 = arith.addi %6, %5 : vector<8x1xi32>
    %8 = tpu.iota {dimensions = array<i32: 1>} : vector<8x8xi32>
    %9 = vector.broadcast %7 : vector<8x1xi32> to vector<8x8xi32>
    %10 = arith.cmpi eq, %8, %9 : vector<8x8xi32>
    %cst_5 = arith.constant -1.000000e+30 : f32
    %11 = vector.broadcast %cst_5 : f32 to vector<8x8xf32>
    %12 = arith.select %10, %11, %2 : vector<8x8xi1>, vector<8x8xf32>
    %cst_6 = arith.constant dense<0xFF800000> : vector<8xf32>
    %13 = vector.multi_reduction <maximumf>, %12, %cst_6 [1] : vector<8x8xf32> to vector<8xf32>
    %14 = vector.shape_cast %13 : vector<8xf32> to vector<8x1xf32>
    %15 = vector.broadcast %14 : vector<8x1xf32> to vector<8x8xf32>
    %16 = arith.subf %12, %15 : vector<8x8xf32>
    %17 = math.exp %16 : vector<8x8xf32>
    %cst_7 = arith.constant dense<0.000000e+00> : vector<8xf32>
    %18 = vector.multi_reduction <add>, %17, %cst_7 [1] : vector<8x8xf32> to vector<8xf32>
    %19 = vector.shape_cast %18 : vector<8xf32> to vector<8x1xf32>
    %20 = math.log %19 : vector<8x1xf32>
    %21 = arith.addf %14, %20 : vector<8x1xf32>
    %22 = arith.subf %21, %3 : vector<8x1xf32>
    %c0_8 = arith.constant 0 : index
    %c0_9 = arith.constant 0 : index
    %23 = vector.load %arg5[%c0_8, %c0_9] : memref<8x1xf32, #tpu.memory_space<vmem>>, vector<8x1xf32>
    tpu.vector_store %arg5[%c0_8, %c0_9], %22 {strides = array<i32>} : memref<8x1xf32, #tpu.memory_space<vmem>>, vector<8x1xf32>,
    %c4_i32 = arith.constant 4 : i32
    %24 = vector.broadcast %c4_i32 : i32 to vector<8x1xi32>
    %25 = arith.cmpi slt, %7, %24 : vector<8x1xi32>
    %c4_i32_10 = arith.constant 4 : i32
    %26 = vector.broadcast %c4_i32_10 : i32 to vector<8x1xi32>
    %27 = arith.subi %7, %26 : vector<8x1xi32>
    %28 = arith.select %25, %7, %27 : vector<8x1xi1>, vector<8x1xi32>
    %c4_i32_11 = arith.constant 4 : i32
    %29 = vector.broadcast %c4_i32_11 : i32 to vector<8x1xi32>
    %30 = arith.addi %28, %29 : vector<8x1xi32>
    %31 = vector.extract_strided_slice %2 {offsets = [0, 7], sizes = [8, 1], strides = [1, 1]} : vector<8x8xf32> to vector<8x1xf32>
    %32 = vector.extract_strided_slice %2 {offsets = [0, 0], sizes = [8, 7], strides = [1, 1]} : vector<8x8xf32> to vector<8x7xf32>
    %33 = tpu.concatenate %31, %32 in 1 : vector<8x1xf32>, vector<8x7xf32> -> vector<8x8xf32>
    %34 = vector.extract_strided_slice %2 {offsets = [0, 1], sizes = [8, 7], strides = [1, 1]} : vector<8x8xf32> to vector<8x7xf32>
    %35 = vector.extract_strided_slice %2 {offsets = [0, 0], sizes = [8, 1], strides = [1, 1]} : vector<8x8xf32> to vector<8x1xf32>
    %36 = tpu.concatenate %34, %35 in 1 : vector<8x7xf32>, vector<8x1xf32> -> vector<8x8xf32>
    %37 = vector.broadcast %28 : vector<8x1xi32> to vector<8x8xi32>
    %38 = arith.cmpi sle, %8, %37 : vector<8x8xi32>
    %39 = vector.broadcast %30 : vector<8x1xi32> to vector<8x8xi32>
    %40 = arith.cmpi slt, %8, %39 : vector<8x8xi32>
    %41 = arith.select %40, %2, %36 : vector<8x8xi1>, vector<8x8xf32>
    %42 = arith.select %38, %33, %41 : vector<8x8xi1>, vector<8x8xf32>
    %c0_i32 = arith.constant 0 : i32
    %43 = vector.broadcast %c0_i32 : i32 to vector<8x8xi32>
    %44 = arith.cmpi eq, %8, %43 : vector<8x8xi32>
    %45 = vector.shape_cast %3 : vector<8x1xf32> to vector<8x1xf32>
    %46 = vector.broadcast %45 : vector<8x1xf32> to vector<8x8xf32>
    %47 = arith.select %44, %46, %42 : vector<8x8xi1>, vector<8x8xf32>
    %48 = vector.extract_strided_slice %47 {offsets = [0, 0], sizes = [8, 7], strides = [1, 1]} : vector<8x8xf32> to vector<8x7xf32>
    %c0_12 = arith.constant 0 : index
    %c0_13 = arith.constant 0 : index
    %49 = vector.load %arg4[%c0_12, %c0_13] : memref<8x7xf32, #tpu.memory_space<vmem>>, vector<8x7xf32>
    tpu.vector_store %arg4[%c0_12, %c0_13], %48 {strides = array<i32>} : memref<8x7xf32, #tpu.memory_space<vmem>>, vector<8x7xf32>,
    return
  }
  func.func @transform_0(%arg0: i32) -> (i32, i32) {
    %c0_i32 = arith.constant 0 : i32
    %c0_i32_0 = arith.constant 0 : i32
    return %arg0, %c0_i32 : i32, i32
  }
  func.func @transform_1(%arg0: i32) -> (i32, i32) {
    %c0_i32 = arith.constant 0 : i32
    %c0_i32_0 = arith.constant 0 : i32
    %c0_i32_1 = arith.constant 0 : i32
    return %c0_i32, %c0_i32_0 : i32, i32
  }
  func.func @transform_2(%arg0: i32) -> (i32, i32) {
    %c0_i32 = arith.constant 0 : i32
    %c0_i32_0 = arith.constant 0 : i32
    return %arg0, %c0_i32 : i32, i32
  }
  func.func @transform_3(%arg0: i32) -> (i32, i32) {
    %c0_i32 = arith.constant 0 : i32
    %c0_i32_0 = arith.constant 0 : i32
    return %arg0, %c0_i32 : i32, i32
  }
  func.func @transform_4(%arg0: i32) -> (i32, i32) {
    %c0_i32 = arith.constant 0 : i32
    %c0_i32_0 = arith.constant 0 : i32
    return %arg0, %c0_i32 : i32, i32
  }
}

</mosaic_0001>

<llo_original>
// kernel: _forward_impl.1
$region0: #{_forward_impl.1}
  #allocation0 [shape = 'u32[]', space=smem, size = 0x4, offset = 0x4, fixed_abs, tag = 'smem constant byte address 0x4 - core index']
  #allocation1 [shape = 'u32[144,128]{1,0:T(1,128)}', space=vmem, size = 0x12000, scoped, tag = 'internal scratch']
  %s0 = inlined_call_operand.vmem [shape: f32[8,32], index: 0, kind: input, shape index: {}]
  %s1 = inlined_call_operand.vmem [shape: f32[32,8], index: 1, kind: input, shape index: {}]
  %s2 = inlined_call_operand.vmem [shape: f32[8,1], index: 2, kind: input, shape index: {}]
  %s3 = inlined_call_operand.hbm [shape: f32[8,7], index: 3, kind: output, shape index: {0}]
  %s4 = inlined_call_operand.vmem [shape: f32[8,1], index: 4, kind: output, shape index: {1}]
  %5 = xla_tuple %s3, %s4
  %s6 = sld [smem:[#allocation0]]
  $region30: #{_forward_impl.1} parent=0
    _
  %s8 = ssub.s32 1, %s6
  %s9 = scalar_select 0, %s8, %s6
  $region1: #{_forward_impl.1} parent=0
    #allocation2 [shape = 'u8[4096]{0}', space=vmem, size = 0x1000, scoped, tag = 'output window, operand 0, single buffered']
    #allocation3 [shape = 's32[1]{0}', space=sflag, size = 0x4, scoped, tag = 'scoped memory for _forward_impl.1']
    %10 = vsyncpa [#allocation3], 0
    // Predicated region
    $region2: #{_forward_impl.1} parent=1 // pred_check
      _
    $region3: #{_forward_impl.1} parent=1 // pred_check_branch
      %12 = sbr.rel (0) target = $region5
    $region4: #{_forward_impl.1} parent=1 // pred_region
      _
    $region5: #{_forward_impl.1} parent=1 // pred_fallthru
      _
    // Predicated region
    $region6: #{_forward_impl.1} parent=1 // pred_check
      _
    $region7: #{_forward_impl.1} parent=1 // pred_check_branch
      %14 = sbr.rel (0) target = $region9
    $region8: #{_forward_impl.1} parent=1 // pred_region
      _
    $region9: #{_forward_impl.1} parent=1 // pred_fallthru
      _
    // Predicated region
    $region10: #{_forward_impl.1} parent=1 // pred_check
      _
    $region11: #{_forward_impl.1} parent=1 // pred_check_branch
      %16 = sbr.rel (0) target = $region13
    $region12: #{_forward_impl.1} parent=1 // pred_region
      _
    $region13: #{_forward_impl.1} parent=1 // pred_fallthru
      _
    %v17 = vld [vmem:[%s0] sm:$0xff]
    %v18 = vld [vmem:[%s1] sm:$0xff]
    %v19 = vld [vmem:[%s1 + $0x8] sm:$0xff]
    %v20 = vld [vmem:[%s1 + $0x10] sm:$0xff]
    %v21 = vld [vmem:[%s1 + $0x18] sm:$0xff]
    %vm22 = vcmask 261120
    %v24 = vsel %vm22, %v17, 0
    %26 = vmatprep.subr.mxu0 0.0
    %27 = vmatpush1.msra.mxu0 %v18
    %28 = vmatprep.subr.mxu0 0.0
    %29 = vmatpush1.msra.mxu0 %v19
    %30 = vmatprep.subr.mxu0 0.0
    %31 = vmatpush1.msra.mxu0 %v20
    %32 = vmatprep.subr.mxu0 0.0
    %33 = vmatpush1.msra.mxu0 %v21
    %34 = vmatprep.subr.mxu0 0.0
    %35 = vmatpush1.msra.mxu0 0.0
    %36 = vmatprep.subr.mxu0 0.0
    %37 = vmatpush1.msra.mxu0 0.0
    %38 = vmatprep.subr.mxu0 0.0
    %39 = vmatpush1.msra.mxu0 0.0
    %40 = vmatprep.subr.mxu0 0.0
    %41 = vmatpush1.msra.mxu0 0.0
    %42 = vmatprep.subr.mxu0 0.0
    %43 = vmatpush1.msra.mxu0 0.0
    %44 = vmatprep.subr.mxu0 0.0
    %45 = vmatpush1.msra.mxu0 0.0
    %46 = vmatprep.subr.mxu0 0.0
    %47 = vmatpush1.msra.mxu0 0.0
    %48 = vmatprep.subr.mxu0 0.0
    %49 = vmatpush1.msra.mxu0 0.0
    %50 = vmatprep.subr.mxu0 0.0
    %51 = vmatpush1.msra.mxu0 0.0
    %52 = vmatprep.subr.mxu0 0.0
    %53 = vmatpush1.msra.mxu0 0.0
    %54 = vmatprep.subr.mxu0 0.0
    %55 = vmatpush1.msra.mxu0 0.0
    %56 = vmatprep.subr.mxu0 0.0
    %57 = vmatpush1.msra.mxu0 0.0
    %58 = vmatprep.subr.mxu0 0.0
    %59 = vmatpush1.msra.mxu0 0.0
    %60 = vmatprep.subr.mxu0 0.0
    %61 = vmatpush1.msra.mxu0 0.0
    %62 = vmatprep.subr.mxu0 0.0
    %63 = vmatpush1.msra.mxu0 0.0
    %64 = vmatprep.subr.mxu0 0.0
    %65 = vmatpush1.msra.mxu0 0.0
    %66 = vmatprep.subr.mxu0 0.0
    %67 = vmatpush1.msra.mxu0 0.0
    %68 = vmatprep.subr.mxu0 0.0
    %69 = vmatpush1.msra.mxu0 0.0
    %70 = vmatprep.subr.mxu0 0.0
    %71 = vmatpush1.msra.mxu0 0.0
    %72 = vmatprep.subr.mxu0 0.0
    %73 = vmatpush1.msra.mxu0 0.0
    %74 = vmatprep.subr.mxu0 0.0
    %75 = vmatpush1.msra.mxu0 0.0
    %76 = vmatprep.subr.mxu0 0.0
    %77 = vmatpush1.msra.mxu0 0.0
    %78 = vmatprep.subr.mxu0 0.0
    %79 = vmatpush1.msra.mxu0 0.0
    %80 = vmatprep.subr.mxu0 0.0
    %81 = vmatpush1.msra.mxu0 0.0
    %82 = vmatprep.subr.mxu0 0.0
    %83 = vmatpush1.msra.mxu0 0.0
    %84 = vmatprep.subr.mxu0 0.0
    %85 = vmatpush1.msra.mxu0 0.0
    %86 = vmatprep.subr.mxu0 0.0
    %87 = vmatpush1.msra.mxu0 0.0
    %88 = vmatprep.subr.mxu0 0.0
    %89 = vmatpush1.msra.mxu0 0.0
    %90 = vmatprep.mubr.f32.mxu0 0.0
    %91 = vmatmul.mubr.f32.gmra.mrb[0].mxu0 %v24
    %v92 = vpop.f32.mrb[0].mxu0
    %v93 = vadd.f32 0.0, %v92
    %v94 = vpop.f32.mrb[0].mxu0
    %95 = vdwg.mxu0
    %v96 = vld [vmem:[%s2] sm:$0xff]
    %s97 = smul.u32 0, 8
    %v98 = vlaneseq
    %v99 = vshrl.u32 %v98, 7
    %v100 = vstv %s97
    %v101 = vadd.s32 %v100, %v99
    %v102 = vlaneseq
    %v103 = vand.u32 %v102, 127
    %vm104 = vcmp.eq.s32.totalorder %v103, %v101
    %v105 = vsel %vm104, -1e+30, %v93
    %vm106 = vcmask 64512
    %v107 = vsel %vm106, %v105, -inf
    %108 = vmax.xlane.f32.xlu0 %v107
    %v109 = vpop.xlane.xlu0 %108
    %v110 = vsub.f32 %v105, %v109
    %v111 = vmul.f32 %v110, 1.442695
    %v112 = vpow.pop %v111
    %v113 = vsel %vm106, %v112, 0.0
    %114 = vadd.xlane.f32.xlu0 %v113
    %v115 = vpop.xlane.xlu0 %114
    %v116 = vlog2.pop %v115
    %v117 = vmul.f32 %v116, 0.6931472
    %v118 = vadd.f32 %v109, %v117
    %v119 = vsub.f32 %v118, %v96
    %vm120 = vcmask 7168
    %121 = vst.msk [vmem:[%s4] sm:$0xff] %vm120, %v119
    %vm122 = vcmp.lt.s32.totalorder %v101, 4
    %v123 = vsub.s32 %v101, 4
    %v124 = vsel %vm122, %v101, %v123
    %v125 = vadd.s32 %v124, 4
    %127 = vrot.lane.b32.xlu0 %v93, 121
    %v128 = vpop.permute.xlu0 %127
    %130 = vrot.lane.b32.xlu0 %v93, 1
    %v131 = vpop.permute.xlu0 %130
    %v133 = vsel %vm120, %v128, %v131
    %134 = vrot.lane.b32.xlu0 %v93, 127
    %v135 = vpop.permute.xlu0 %134
    %137 = vrot.lane.b32.xlu0 %v93, 7
    %v138 = vpop.permute.xlu0 %137
    %vm140 = vcmask 56320
    %v141 = vsel %vm140, %v135, %v138
    %vm142 = vcmp.le.s32.totalorder %v103, %v124
    %vm143 = vcmp.lt.s32.totalorder %v103, %v125
    %v144 = vsel %vm143, %v93, %v141
    %v145 = vsel %vm142, %v133, %v144
    %vm146 = vcmp.eq.s32.totalorder %v103, 0
    %148 = vset.pattern.permute.xlu0 0
    %149 = vperm.xlu0 %148, %v96
    %v150 = vpop.permute.xlu0 %149
    %v152 = vsel %vm146, %v150, %v145
    %153 = vst.msk [vmem:[#allocation2] sm:$0xff] %vm140, %v152
    // Predicated region
    $region14: #{_forward_impl.1} parent=1 // pred_check
      _
    $region15: #{_forward_impl.1} parent=1 // pred_check_branch
      %155 = sbr.rel (0) target = $region17
    $region16: #{_forward_impl.1} parent=1 // pred_region
      %s157 = ssub.s32 128, 128
      %158 = vsyncadd [#allocation3], %s157
      %s160 = sshll.u32 [#allocation2], 4
      %s161 = int_to_ptr.vmem [resolvable:$true] %s160
      %163 = dma.vmem_to_hbm [thread:$0]  %s161, 128, %s3, [#allocation3]
    $region17: #{_forward_impl.1} parent=1 // pred_fallthru
      _
    // Predicated region
    $region18: #{_forward_impl.1} parent=1 // pred_check
      _
    $region19: #{_forward_impl.1} parent=1 // pred_check_branch
      %165 = sbr.rel (0) target = $region21
    $region20: #{_forward_impl.1} parent=1 // pred_region
      _
    $region21: #{_forward_impl.1} parent=1 // pred_fallthru
      _
    // Predicated region
    $region22: #{_forward_impl.1} parent=1 // pred_check
      _
    $region23: #{_forward_impl.1} parent=1 // pred_check_branch
      %167 = sbr.rel (0) target = $region25
    $region24: #{_forward_impl.1} parent=1 // pred_region
      %168 = dma.done [#allocation3], 128
    $region25: #{_forward_impl.1} parent=1 // pred_fallthru
      _
    // Predicated region
    $region26: #{_forward_impl.1} parent=1 // pred_check
      _
    $region27: #{_forward_impl.1} parent=1 // pred_check_branch
      %170 = sbr.rel (0) target = $region29
    $region28: #{_forward_impl.1} parent=1 // pred_region
      _
    $region29: #{_forward_impl.1} parent=1 // pred_fallthru
      _
    %171 = vsyncpa [#allocation3], 1

</llo_original>
